<compile_context>
chip_gen: v7x
topology: tpu7x:2x2x1
jax: 0.10.0
libtpu: 0.0.40
codegen_flags: <defaults>
</compile_context>

<pallas_src>
import jax
import jax.numpy as jnp
from jax import lax
from jax.experimental import pallas as pl
from jax.experimental.pallas import tpu as pltpu


def _vmem_capacity_bytes():
    try:
        return int(pltpu.get_tpu_info().vmem_capacity_bytes)
    except Exception:
        return 64 * 1024 * 1024   # conservative (v7x per-TC) fallback


_VMEM_CAP = max(32 * 1024 * 1024, _vmem_capacity_bytes())
_VMEM_LIMIT = max(32 * 1024 * 1024, (3 * _VMEM_CAP) // 4)   # 48 MiB v7x / 96 MiB v5e,v6e
_CHUNK_BUDGET = (4 if _VMEM_CAP <= 64 * 1024 * 1024 else 12) * 1024 * 1024


def _pick_row_block(M, in_row_bytes, out_row_bytes):
    # Double-buffered input + output rows per grid step; grid uses cdiv so bm need not
    # divide M (the boundary block is masked on write-back).
    per_row = 2 * in_row_bytes + 2 * out_row_bytes
    max_bm = max(8, _CHUNK_BUDGET // max(per_row, 1))
    for cand in (1024, 512, 256, 128, 64, 32, 16, 8):
        if cand <= max_bm and cand <= M:
            return cand
    return 8


def _pick_time_chunk(T, B, H):
    # bf16 gates (B,4H) + bf16 output (B,H) per timestep, double buffered.
    step_bytes = 2 * (B * 4 * H * 2) + 2 * (B * H * 2)
    return max(1, min(T, _CHUNK_BUDGET // max(step_bytes, 1)))


# ----------------------------------------------------------------------------
# Kernel 1: fused-direction, time-parallel input projection.
# ----------------------------------------------------------------------------
def _input_proj_kernel(x_ref, w_ref, b_ref, g_ref):
    # x_ref: (S, bm, Din_s) f32/bf16   w_ref: (S, Din_s, 8H) bf16   b_ref: (1, 8H) f32
    # g_ref: (2, bm, 4H) bf16 gate pre-activations (fwd, bwd), bias folded in.
    s_count = x_ref.shape[0]
    acc = jnp.dot(x_ref[0].astype(jnp.bfloat16), w_ref[0],
                  preferred_element_type=jnp.float32)
    for s in range(1, s_count):       # split-K over direction halves for layers >= 1
        acc = acc + jnp.dot(x_ref[s].astype(jnp.bfloat16), w_ref[s],
                            preferred_element_type=jnp.float32)
    acc = acc + b_ref[...]
    h4 = acc.shape[-1] // 2
    g_ref[0] = acc[:, :h4].astype(g_ref.dtype)
    g_ref[1] = acc[:, h4:].astype(g_ref.dtype)


def _input_projection(x_rows, wih, bias):
    # x_rows: (S, M, Din_s); wih: (S, Din_s, 8H) bf16; bias: (1, 8H) f32
    # Returns gate pre-activations (2, M, 4H) bf16.
    S, M, Din = x_rows.shape
    H8 = wih.shape[-1]
    H4 = H8 // 2
    in_row = S * Din * x_rows.dtype.itemsize
    out_row = 2 * H4 * 2
    bm = _pick_row_block(M, in_row, out_row)
    return pl.pallas_call(
        _input_proj_kernel,
        grid=(pl.cdiv(M, bm),),
        out_shape=jax.ShapeDtypeStruct((2, M, H4), jnp.bfloat16),
        in_specs=[
            pl.BlockSpec((S, bm, Din), lambda m: (0, m, 0)),
            pl.BlockSpec((S, Din, H8), lambda m: (0, 0, 0)),
            pl.BlockSpec((1, H8), lambda m: (0, 0)),
        ],
        out_specs=pl.BlockSpec((2, bm, H4), lambda m: (0, m, 0)),
        compiler_params=pltpu.CompilerParams(
            dimension_semantics=("parallel",),
            vmem_limit_bytes=_VMEM_LIMIT),
    )(x_rows, wih, bias)


# ----------------------------------------------------------------------------
# Kernel 2: sequential bidirectional recurrence, time-chunked, state in scratch.
# ----------------------------------------------------------------------------
def _bilstm_recurrent_kernel(maxlen_ref, len_ref, g_ref, whh_ref, out_ref, h_s, c_s):
    d = pl.program_id(0)          # direction: 0 = forward, 1 = backward
    c = pl.program_id(1)          # time-chunk index within this direction's sweep
    nc = pl.num_programs(1)
    Tc = g_ref.shape[0]
    H = h_s.shape[-1]

    @pl.when(c == 0)              # start of each direction's sweep
    def _():
        h_s[...] = jnp.zeros_like(h_s)
        c_s[...] = jnp.zeros_like(c_s)

    max_len = maxlen_ref[0]                 # SMEM scalar (prefetched)
    c_eff = c + d * (nc - 1 - 2 * c)        # chunk position on the absolute time axis
    t0 = c_eff * Tc
    # Timesteps in this chunk below max(lengths); everything above is fully padded
    # and only needs a zeroed output block (no matmul / EUP work).
    t_hi = jnp.clip(max_len - t0, 0, Tc)

    @pl.when(t_hi < Tc)
    def _():
        out_ref[...] = jnp.zeros_like(out_ref)

    lengths = len_ref[...]                  # (B, 1) int32
    whh = whh_ref[...]                      # (H, 4H) bf16, VMEM-resident

    def step(t, carry):
        row = t + d * (Tc - 1 - 2 * t)      # fwd: ascending rows; bwd: descending
        abs_t = t0 + row
        gates = g_ref[row] + jnp.dot(h_s[...], whh,
                                     preferred_element_type=jnp.float32)
        # PyTorch gate order i, f, g, o.
        i = jax.nn.sigmoid(gates[:, 0 * H:1 * H])
        f = jax.nn.sigmoid(gates[:, 1 * H:2 * H])
        g = jnp.tanh(gates[:, 2 * H:3 * H])
        o = jax.nn.sigmoid(gates[:, 3 * H:4 * H])
        c_new = f * c_s[...] + i * g
        h_new = (o * jnp.tanh(c_new)).astype(jnp.bfloat16)   # single bf16 cast/step
        valid = lengths > abs_t             # packed-sequence mask, (B, 1)
        c_s[...] = jnp.where(valid, c_new, c_s[...])
        h_s[...] = jnp.where(valid, h_new, h_s[...])
        out_ref[row] = jnp.where(valid, h_new, jnp.zeros_like(h_new))
        return carry

    # Dynamic trip count skips all compute past max(lengths) in this chunk.
    lo = d * (Tc - t_hi)
    lax.fori_loop(lo, lo + t_hi, step, 0)


def _bilstm_recurrence(max_len, lengths_b1, gates, whh):
    # gates: (2, T, B, 4H) bf16; whh: (2, H, 4H) bf16 -> (2, T, B, H) bf16
    _, T, B, H4 = gates.shape
    H = H4 // 4
    Tc = _pick_time_chunk(T, B, H)
    nc = pl.cdiv(T, Tc)

    def _tmap(d, c, ml):
        # forward (d=0): chunk c; backward (d=1): chunk nc-1-c (reverse time sweep).
        return (d, c + d * (nc - 1 - 2 * c), 0, 0)

    return pl.pallas_call(
        _bilstm_recurrent_kernel,
        grid_spec=pltpu.PrefetchScalarGridSpec(
            num_scalar_prefetch=1,
            grid=(2, nc),
            in_specs=[
                pl.BlockSpec((B, 1), lambda d, c, ml: (0, 0)),
                pl.BlockSpec((None, Tc, B, H4), _tmap),
                pl.BlockSpec((None, H, H4), lambda d, c, ml: (d, 0, 0)),
            ],
            out_specs=pl.BlockSpec((None, Tc, B, H), _tmap),
            scratch_shapes=[pltpu.VMEM((B, H), jnp.bfloat16),   # h state (bf16)
                            pltpu.VMEM((B, H), jnp.float32)],   # c state (f32)
        ),
        out_shape=jax.ShapeDtypeStruct((2, T, B, H), jnp.bfloat16),
        compiler_params=pltpu.CompilerParams(
            dimension_semantics=("parallel", "arbitrary"),
            vmem_limit_bytes=_VMEM_LIMIT),
    )(max_len, lengths_b1, gates, whh)


def _bilstm_layer(x_rows, T, B, max_len, lengths_b1, layer_p):
    """x_rows: (S, T*B, Din_s) -> (2, T, B, H) bf16 per-direction hidden states."""
    H = layer_p["whh"].shape[1]
    gates = _input_projection(x_rows, layer_p["wih"], layer_p["bias"])   # (2, T*B, 4H)
    gates = gates.reshape(2, T, B, 4 * H)
    return _bilstm_recurrence(max_len, lengths_b1, gates, layer_p["whh"])


class RNNEncoderPallas:
    """JAX/Pallas port of the PyTorch RNNEncoder (inference mode)."""

    def __init__(self, input_size, hidden_size, num_layers, drop_prob=0.0,
                 key=jax.random.PRNGKey(42)):
        self.input_size = input_size
        self.hidden_size = hidden_size
        self.num_layers = num_layers
        self.drop_prob = drop_prob

        H = hidden_size
        k = 1.0 / float(H) ** 0.5
        self.params = []
        for layer in range(num_layers):
            d_in = input_size if layer == 0 else 2 * H
            w_cols, b_cols, whh = [], [], []
            for _ in range(2):  # forward, backward
                key, k1, k2, k3, k4 = jax.random.split(key, 5)
                w_ih = jax.random.uniform(k1, (4 * H, d_in), jnp.float32, -k, k)
                w_hh = jax.random.uniform(k2, (4 * H, H), jnp.float32, -k, k)
                b_ih = jax.random.uniform(k3, (4 * H,), jnp.float32, -k, k)
                b_hh = jax.random.uniform(k4, (4 * H,), jnp.float32, -k, k)
                w_cols.append(jnp.transpose(w_ih))            # (d_in, 4H)
                whh.append(jnp.transpose(w_hh))                # (H, 4H)
                b_cols.append(b_ih + b_hh)
            # Fused-direction W_ih: (d_in, 8H).  For layers >= 1, split the d_in axis
            # into the two direction halves so the previous layer's (2, T*B, H) output
            # is consumed without any concatenation (split-K in the projection kernel).
            wih = jnp.concatenate(w_cols, axis=-1)             # (d_in, 8H)
            S = 1 if layer == 0 else 2
            wih = wih.reshape(S, d_in // S, 8 * H)
            self.params.append({
                "wih": wih.astype(jnp.bfloat16),                       # (S, Din_s, 8H)
                "whh": jnp.stack(whh).astype(jnp.bfloat16),            # (2, H, 4H)
                "bias": jnp.concatenate(b_cols).reshape(1, 8 * H),     # (1, 8H) f32
            })

    def __call__(self, x, lengths):
        """x: (B, T, input_size); lengths: (B,). Returns (B, T, 2*hidden_size) f32."""
        B, T, _ = x.shape
        H = self.hidden_size
        # Pad batch to a multiple of 8 (f32/bf16 sublane) with length-0 dummy rows;
        # the length mask keeps their state/output at zero; sliced off at the end.
        Bp = -(-B // 8) * 8
        if Bp != B:
            x = jnp.pad(x, ((0, Bp - B), (0, 0), (0, 0)))
            lengths = jnp.pad(lengths, (0, Bp - B))
        lengths = lengths.astype(jnp.int32)
        lengths_b1 = lengths.reshape(Bp, 1)
        max_len = jnp.minimum(jnp.max(lengths), jnp.int32(T)).reshape(1)

        # Time-major rows; layer 0 keeps f32 in HBM (cast to bf16 inside the kernel).
        h = jnp.transpose(x, (1, 0, 2)).reshape(1, T * Bp, -1)
        for lp in self.params:
            # TODO(synk): inter-layer LSTM dropout and the final F.dropout are
            # identity here (inference mode).
            out = _bilstm_layer(h, T, Bp, max_len, lengths_b1, lp)    # (2, T, Bp, H)
            h = out.reshape(2, T * Bp, H)                             # next layer input

        out = h.reshape(2, T, Bp, H)
        # Single transpose at the very end merges the direction concat with the
        # time/batch-major swap (one HBM copy total, instead of per-layer concats).
        out = jnp.transpose(out, (2, 1, 0, 3)).reshape(Bp, T, 2 * H)
        return out[:B].astype(jnp.float32)


if __name__ == "__main__":
    B, T, input_size, hidden_size, num_layers = 2, 8, 16, 32, 2

    key = jax.random.PRNGKey(0)
    kx, _ = jax.random.split(key)
    x = jax.random.normal(kx, (B, T, input_size), dtype=jnp.float32)
    lengths = jnp.array([8, 5], dtype=jnp.int32)

    enc = RNNEncoderPallas(input_size, hidden_size, num_layers, drop_prob=0.0)
    out = jax.block_until_ready(enc(x, lengths))

    assert out.shape == (B, T, 2 * hidden_size), out.shape
    # Packed-sequence semantics: padded positions (t >= length) are zero.
    assert bool(jnp.all(out[1, 5:, :] == 0.0))
    print("KERNEL_OK")
</pallas_src>

<mosaic_0001>
module attributes {stable_mosaic.version = 11 : i64} {
  func.func @_input_proj_kernel(%arg0: i32, %arg1: memref<1x64x16xf32, #tpu.memory_space<vmem>>, %arg2: memref<1x16x256xbf16, #tpu.memory_space<vmem>>, %arg3: memref<1x256xf32, #tpu.memory_space<vmem>>, %arg4: memref<2x64x128xbf16, #tpu.memory_space<vmem>>) attributes {dimension_semantics = [#tpu.dimension_semantics<parallel>], iteration_bounds = array<i64: 1>, scalar_prefetch = 0 : i64, scratch_operands = 0 : i64, tpu.core_type = #tpu.core_type<tc>, window_params = [{transform_indices = @transform_0, window_bounds = array<i64: 1, 64, 16>}, {pipeline_mode = #tpu.pipeline_mode<synchronous>, transform_indices = @transform_1, window_bounds = array<i64: 1, 16, 256>}, {pipeline_mode = #tpu.pipeline_mode<synchronous>, transform_indices = @transform_2, window_bounds = array<i64: 1, 256>}, {transform_indices = @transform_3, window_bounds = array<i64: 2, 64, 128>}]} {
    %c0 = arith.constant 0 : index
    %c0_0 = arith.constant 0 : index
    %c0_1 = arith.constant 0 : index
    %0 = vector.load %arg1[%c0, %c0_0, %c0_1] : memref<1x64x16xf32, #tpu.memory_space<vmem>>, vector<1x64x16xf32>
    %1 = vector.shape_cast %0 : vector<1x64x16xf32> to vector<64x16xf32>
    %2 = arith.truncf %1 : vector<64x16xf32> to vector<64x16xbf16>
    %c0_2 = arith.constant 0 : index
    %c0_3 = arith.constant 0 : index
    %c0_4 = arith.constant 0 : index
    %3 = vector.load %arg2[%c0_2, %c0_3, %c0_4] : memref<1x16x256xbf16, #tpu.memory_space<vmem>>, vector<1x16x256xbf16>
    %4 = vector.shape_cast %3 : vector<1x16x256xbf16> to vector<16x256xbf16>
    %cst = arith.constant dense<0.000000e+00> : vector<64x256xf32>
    %5 = tpu.matmul %2, %4, %cst {dimension_numbers = #tpu.dot_dimension_numbers<[1], [0], [0], [1], [0, 0, 1, 1], [], []>} : vector<64x16xbf16>, vector<16x256xbf16>, vector<64x256xf32> -> vector<64x256xf32>
    %c0_5 = arith.constant 0 : index
    %c0_6 = arith.constant 0 : index
    %6 = vector.load %arg3[%c0_5, %c0_6] : memref<1x256xf32, #tpu.memory_space<vmem>>, vector<1x256xf32>
    %7 = vector.broadcast %6 : vector<1x256xf32> to vector<64x256xf32>
    %8 = arith.addf %5, %7 : vector<64x256xf32>
    %9 = vector.extract_strided_slice %8 {offsets = [0, 0], sizes = [64, 128], strides = [1, 1]} : vector<64x256xf32> to vector<64x128xf32>
    %10 = arith.truncf %9 : vector<64x128xf32> to vector<64x128xbf16>
    %c0_7 = arith.constant 0 : index
    %c0_8 = arith.constant 0 : index
    %c0_9 = arith.constant 0 : index
    %11 = vector.load %arg4[%c0_7, %c0_8, %c0_9] : memref<2x64x128xbf16, #tpu.memory_space<vmem>>, vector<1x64x128xbf16>
    %12 = vector.shape_cast %11 : vector<1x64x128xbf16> to vector<64x128xbf16>
    %13 = vector.shape_cast %10 : vector<64x128xbf16> to vector<1x64x128xbf16>
    tpu.vector_store %arg4[%c0_7, %c0_8, %c0_9], %13 {strides = array<i32>} : memref<2x64x128xbf16, #tpu.memory_space<vmem>>, vector<1x64x128xbf16>,
    %14 = vector.extract_strided_slice %8 {offsets = [0, 128], sizes = [64, 128], strides = [1, 1]} : vector<64x256xf32> to vector<64x128xf32>
    %15 = arith.truncf %14 : vector<64x128xf32> to vector<64x128xbf16>
    %c1 = arith.constant 1 : index
    %c0_10 = arith.constant 0 : index
    %c0_11 = arith.constant 0 : index
    %16 = vector.load %arg4[%c1, %c0_10, %c0_11] : memref<2x64x128xbf16, #tpu.memory_space<vmem>>, vector<1x64x128xbf16>
    %17 = vector.shape_cast %16 : vector<1x64x128xbf16> to vector<64x128xbf16>
    %18 = vector.shape_cast %15 : vector<64x128xbf16> to vector<1x64x128xbf16>
    tpu.vector_store %arg4[%c1, %c0_10, %c0_11], %18 {strides = array<i32>} : memref<2x64x128xbf16, #tpu.memory_space<vmem>>, vector<1x64x128xbf16>,
    return
  }
  func.func @transform_0(%arg0: i32) -> (i32, i32, i32) {
    %c0_i32 = arith.constant 0 : i32
    %c0_i32_0 = arith.constant 0 : i32
    %c0_i32_1 = arith.constant 0 : i32
    return %c0_i32, %arg0, %c0_i32_0 : i32, i32, i32
  }
  func.func @transform_1(%arg0: i32) -> (i32, i32, i32) {
    %c0_i32 = arith.constant 0 : i32
    %c0_i32_0 = arith.constant 0 : i32
    %c0_i32_1 = arith.constant 0 : i32
    %c0_i32_2 = arith.constant 0 : i32
    return %c0_i32, %c0_i32_0, %c0_i32_1 : i32, i32, i32
  }
  func.func @transform_2(%arg0: i32) -> (i32, i32) {
    %c0_i32 = arith.constant 0 : i32
    %c0_i32_0 = arith.constant 0 : i32
    %c0_i32_1 = arith.constant 0 : i32
    return %c0_i32, %c0_i32_0 : i32, i32
  }
  func.func @transform_3(%arg0: i32) -> (i32, i32, i32) {
    %c0_i32 = arith.constant 0 : i32
    %c0_i32_0 = arith.constant 0 : i32
    %c0_i32_1 = arith.constant 0 : i32
    return %c0_i32, %arg0, %c0_i32_0 : i32, i32, i32
  }
}

</mosaic_0001>

<llo_original>
// kernel: tpu_custom_call.1
$region0: #{tpu_custom_call.1}
  #allocation0 [shape = 'u32[]', space=smem, size = 0x4, offset = 0x4, fixed_abs, tag = 'smem constant byte address 0x4 - core index']
  #allocation1 [shape = 'u32[144,128]{1,0:T(1,128)}', space=vmem, size = 0x12000, scoped, tag = 'internal scratch']
  %s0 = inlined_call_operand.vmem [shape: f32[1,64,16], index: 0, kind: input, shape index: {}]
  %s1 = inlined_call_operand.vmem [shape: bf16[1,16,256], index: 1, kind: input, shape index: {}]
  %s2 = inlined_call_operand.vmem [shape: f32[1,256], index: 2, kind: input, shape index: {}]
  %s3 = inlined_call_operand.hbm [shape: bf16[2,64,128], index: 3, kind: output, shape index: {}]
  %s4 = sld [smem:[#allocation0]]
  $region22: #{tpu_custom_call.1} parent=0
    _
  %s6 = ssub.s32 1, %s4
  %s7 = scalar_select 0, %s6, %s4
  $region1: #{tpu_custom_call.1} parent=0
    #allocation2 [shape = 'u8[32768]{0}', space=vmem, size = 0x8000, scoped, tag = 'output window, operand 0, single buffered']
    #allocation3 [shape = 's32[1]{0}', space=sflag, size = 0x4, scoped, tag = 'scoped memory for tpu_custom_call.1']
    %8 = vsyncpa [#allocation3], 0
    // Predicated region
    $region2: #{tpu_custom_call.1} parent=1 // pred_check
      _
    $region3: #{tpu_custom_call.1} parent=1 // pred_check_branch
      %10 = sbr.rel (0) target = $region5
    $region4: #{tpu_custom_call.1} parent=1 // pred_region
      _
    $region5: #{tpu_custom_call.1} parent=1 // pred_fallthru
      _
    // Predicated region
    $region6: #{tpu_custom_call.1} parent=1 // pred_check
      _
    $region7: #{tpu_custom_call.1} parent=1 // pred_check_branch
      %12 = sbr.rel (0) target = $region9
    $region8: #{tpu_custom_call.1} parent=1 // pred_region
      _
    $region9: #{tpu_custom_call.1} parent=1 // pred_fallthru
      _
    // Predicated region
    $region10: #{tpu_custom_call.1} parent=1 // pred_check
      _
    $region11: #{tpu_custom_call.1} parent=1 // pred_check_branch
      %14 = sbr.rel (0) target = $region13
    $region12: #{tpu_custom_call.1} parent=1 // pred_region
      _
    $region13: #{tpu_custom_call.1} parent=1 // pred_fallthru
      _
    %v16 = vld [vmem:[%s0] sm:$0xff]
    %v17 = vld [vmem:[%s0 + $0x8] sm:$0xff]
    %v18 = vld [vmem:[%s0 + $0x10] sm:$0xff]
    %v19 = vld [vmem:[%s0 + $0x18] sm:$0xff]
    %v20 = vld [vmem:[%s0 + $0x20] sm:$0xff]
    %v21 = vld [vmem:[%s0 + $0x28] sm:$0xff]
    %v22 = vld [vmem:[%s0 + $0x30] sm:$0xff]
    %v23 = vld [vmem:[%s0 + $0x38] sm:$0xff]
    %v24 = vpack.c.bf16 %v17, %v16
    %v25 = vpack.c.bf16 %v19, %v18
    %v26 = vpack.c.bf16 %v21, %v20
    %v27 = vpack.c.bf16 %v23, %v22
    %v28 = vld [vmem:[%s1] sm:$0xff]
    %v29 = vld [vmem:[%s1 + $0x8] sm:$0xff]
    %v30 = vld [vmem:[%s2] sm:$0x3]
    %v32 = vlaneseq
    %v33 = vshrl.u32 %v32, 7
    %v34 = vsub.s32 0, %v33
    %v35 = vrot.slane %v30, %v34
    %v36 = vlaneseq
    %v37 = vshrl.u32 %v36, 7
    %v38 = vsub.s32 1, %v37
    %v39 = vrot.slane %v30, %v38
    %v44 = vunpack.c.l.b16 %v28
    %v45 = vunpack.c.h.b16 %v28
    %v46 = vunpack.c.l.b16 %v29
    %v47 = vunpack.c.h.b16 %v29
    %v48 = vpack.c.b16 %v46, %v44
    %v49 = vpack.c.b16 %v47, %v45
    %vm52 = vcmask 130048
    %v54 = vsel %vm52, %v24, 0
    %v57 = vsel %vm52, %v25, 0
    %v60 = vsel %vm52, %v26, 0
    %v63 = vsel %vm52, %v27, 0
    %65 = vmatprep.subr.bf16.mxu0 %v49
    %66 = vmatpush1.bf16.msra.mxu0 %v48
    %67 = vmatprep.subr.bf16.mxu0 0
    %68 = vmatpush1.bf16.msra.mxu0 0
    %69 = vmatprep.subr.bf16.mxu0 0
    %70 = vmatpush1.bf16.msra.mxu0 0
    %71 = vmatprep.subr.bf16.mxu0 0
    %72 = vmatpush1.bf16.msra.mxu0 0
    %73 = vmatprep.subr.bf16.mxu0 0
    %74 = vmatpush1.bf16.msra.mxu0 0
    %75 = vmatprep.subr.bf16.mxu0 0
    %76 = vmatpush1.bf16.msra.mxu0 0
    %77 = vmatprep.subr.bf16.mxu0 0
    %78 = vmatpush1.bf16.msra.mxu0 0
    %79 = vmatprep.subr.bf16.mxu0 0
    %80 = vmatpush1.bf16.msra.mxu0 0
    %81 = vmatprep.subr.bf16.mxu0 0
    %82 = vmatpush1.bf16.msra.mxu0 0
    %83 = vmatprep.subr.bf16.mxu0 0
    %84 = vmatpush1.bf16.msra.mxu0 0
    %85 = vmatprep.subr.bf16.mxu0 0
    %86 = vmatpush1.bf16.msra.mxu0 0
    %87 = vmatprep.subr.bf16.mxu0 0
    %88 = vmatpush1.bf16.msra.mxu0 0
    %89 = vmatprep.subr.bf16.mxu0 0
    %90 = vmatpush1.bf16.msra.mxu0 0
    %91 = vmatprep.subr.bf16.mxu0 0
    %92 = vmatpush1.bf16.msra.mxu0 0
    %93 = vmatprep.subr.bf16.mxu0 0
    %94 = vmatpush1.bf16.msra.mxu0 0
    %95 = vmatprep.subr.bf16.mxu0 0
    %96 = vmatpush1.bf16.msra.mxu0 0
    %97 = vmatprep.mubr.bf16.mxu0 0
    %98 = vmatmul.mubr.bf16.gmra.mrb[0].mxu0 %v54
    %v99 = vpop.f32.mrb[0].mxu0
    %v100 = vadd.f32 %v35, %v99
    %v101 = vpop.f32.mrb[0].mxu0
    %v102 = vadd.f32 %v39, %v101
    %v103 = vpop.f32.mrb[0].mxu0
    %v104 = vadd.f32 %v35, %v103
    %v105 = vpop.f32.mrb[0].mxu0
    %v106 = vadd.f32 %v39, %v105
    %107 = vmatprep.mubr.bf16.mxu0 0
    %108 = vmatmul.mubr.bf16.gmra.mrb[0].mxu0 %v57
    %v109 = vpop.f32.mrb[0].mxu0
    %v110 = vadd.f32 %v35, %v109
    %v111 = vpop.f32.mrb[0].mxu0
    %v112 = vadd.f32 %v39, %v111
    %v113 = vpop.f32.mrb[0].mxu0
    %v114 = vadd.f32 %v35, %v113
    %v115 = vpop.f32.mrb[0].mxu0
    %v116 = vadd.f32 %v39, %v115
    %117 = vmatprep.mubr.bf16.mxu0 0
    %118 = vmatmul.mubr.bf16.gmra.mrb[0].mxu0 %v60
    %v119 = vpop.f32.mrb[0].mxu0
    %v120 = vadd.f32 %v35, %v119
    %v121 = vpop.f32.mrb[0].mxu0
    %v122 = vadd.f32 %v39, %v121
    %v123 = vpop.f32.mrb[0].mxu0
    %v124 = vadd.f32 %v35, %v123
    %v125 = vpop.f32.mrb[0].mxu0
    %v126 = vadd.f32 %v39, %v125
    %127 = vmatprep.mubr.bf16.mxu0 0
    %128 = vmatmul.mubr.bf16.gmra.mrb[0].mxu0 %v63
    %v129 = vpop.f32.mrb[0].mxu0
    %v130 = vadd.f32 %v35, %v129
    %v131 = vpop.f32.mrb[0].mxu0
    %v132 = vadd.f32 %v39, %v131
    %v133 = vpop.f32.mrb[0].mxu0
    %v134 = vadd.f32 %v35, %v133
    %v135 = vpop.f32.mrb[0].mxu0
    %v136 = vadd.f32 %v39, %v135
    %137 = vdwg.mxu0
    %v138 = vpack.c.bf16 %v104, %v100
    %v139 = vpack.c.bf16 %v114, %v110
    %v140 = vpack.c.bf16 %v124, %v120
    %v141 = vpack.c.bf16 %v134, %v130
    %v146 = vunpack.c.l.b16 %v138
    %v147 = vunpack.c.h.b16 %v138
    %v148 = vunpack.c.l.b16 %v139
    %v149 = vunpack.c.h.b16 %v139
    %v150 = vunpack.c.l.b16 %v140
    %v151 = vunpack.c.h.b16 %v140
    %v152 = vunpack.c.l.b16 %v141
    %v153 = vunpack.c.h.b16 %v141
    %v154 = vpack.c.b16 %v146, %v146
    %v155 = vpack.c.b16 %v147, %v147
    %v156 = vpack.c.b16 %v148, %v148
    %v157 = vpack.c.b16 %v149, %v149
    %v158 = vpack.c.b16 %v150, %v150
    %v159 = vpack.c.b16 %v151, %v151
    %v160 = vpack.c.b16 %v152, %v152
    %v161 = vpack.c.b16 %v153, %v153
    %170 = vst [vmem:[#allocation2] sm:$0xf] %v154
    %171 = vst [vmem:[#allocation2 + $0x4] sm:$0xf] %v155
    %172 = vst [vmem:[#allocation2 + $0x8] sm:$0xf] %v156
    %173 = vst [vmem:[#allocation2 + $0xc] sm:$0xf] %v157
    %174 = vst [vmem:[#allocation2 + $0x10] sm:$0xf] %v158
    %175 = vst [vmem:[#allocation2 + $0x14] sm:$0xf] %v159
    %176 = vst [vmem:[#allocation2 + $0x18] sm:$0xf] %v160
    %177 = vst [vmem:[#allocation2 + $0x1c] sm:$0xf] %v161
    %v178 = vpack.c.bf16 %v106, %v102
    %v179 = vpack.c.bf16 %v116, %v112
    %v180 = vpack.c.bf16 %v126, %v122
    %v181 = vpack.c.bf16 %v136, %v132
    %v186 = vunpack.c.l.b16 %v178
    %v187 = vunpack.c.h.b16 %v178
    %v188 = vunpack.c.l.b16 %v179
    %v189 = vunpack.c.h.b16 %v179
    %v190 = vunpack.c.l.b16 %v180
    %v191 = vunpack.c.h.b16 %v180
    %v192 = vunpack.c.l.b16 %v181
    %v193 = vunpack.c.h.b16 %v181
    %v194 = vpack.c.b16 %v186, %v186
    %v195 = vpack.c.b16 %v187, %v187
    %v196 = vpack.c.b16 %v188, %v188
    %v197 = vpack.c.b16 %v189, %v189
    %v198 = vpack.c.b16 %v190, %v190
    %v199 = vpack.c.b16 %v191, %v191
    %v200 = vpack.c.b16 %v192, %v192
    %v201 = vpack.c.b16 %v193, %v193
    %s210 = scalar_lea.vmem [#allocation2], 32
    %211 = vst [vmem:[%s210] sm:$0xf] %v194
    %212 = vst [vmem:[%s210 + $0x4] sm:$0xf] %v195
    %213 = vst [vmem:[%s210 + $0x8] sm:$0xf] %v196
    %214 = vst [vmem:[%s210 + $0xc] sm:$0xf] %v197
    %215 = vst [vmem:[%s210 + $0x10] sm:$0xf] %v198
    %216 = vst [vmem:[%s210 + $0x14] sm:$0xf] %v199
    %217 = vst [vmem:[%s210 + $0x18] sm:$0xf] %v200
    %218 = vst [vmem:[%s210 + $0x1c] sm:$0xf] %v201
    // Predicated region
    $region14: #{tpu_custom_call.1} parent=1 // pred_check
      _
    $region15: #{tpu_custom_call.1} parent=1 // pred_check_branch
      %220 = sbr.rel (0) target = $region17
    $region16: #{tpu_custom_call.1} parent=1 // pred_region
      %s222 = ssub.s32 1024, 1024
      %223 = vsyncadd [#allocation3], %s222
      %s224 = sshll.u32 [#allocation2], 4
      %s225 = int_to_ptr.vmem [resolvable:$true] %s224
      %230 = dma.vmem_to_hbm [thread:$0]  %s225, 1024, %s3, [#allocation3], 64, 64, 4
    $region17: #{tpu_custom_call.1} parent=1 // pred_fallthru
      _
    // Predicated region
    $region18: #{tpu_custom_call.1} parent=1 // pred_check
      _
    $region19: #{tpu_custom_call.1} parent=1 // pred_check_branch
      %232 = sbr.rel (0) target = $region21
    $region20: #{tpu_custom_call.1} parent=1 // pred_region
      %233 = dma.done [#allocation3], 1024
    $region21: #{tpu_custom_call.1} parent=1 // pred_fallthru
      _
    %234 = vsyncpa [#allocation3], 1

</llo_original>
